<compile_context>
chip_gen: v5e
topology: v5e:2x2
jax: 0.10.0
libtpu: 0.0.40
codegen_flags: <defaults>
</compile_context>

<pallas_src>
import functools

import jax
import jax.numpy as jnp
from jax.experimental import pallas as pl
from jax.experimental.pallas import tpu as pltpu

INPUT_DIM = 11
HIDDEN_DIM = 100
LATENT_DIM = 10

PAD = 128            # lane-aligned feature width
HEAD_W = 2 * PAD     # fused [mu | logvar] head, each in its own 128-lane group

# Column offsets of each layer inside the packed parameter slab (all multiples
# of 128 -> static slices of the VMEM ref are tile-aligned views).
_OFF_FC1 = 0
_OFF_FC2 = 128
_OFF_HEAD = 256      # width 256 (fused fc_mu | fc_logvar)
_OFF_FC3 = 512
_OFF_FC4 = 640
_OFF_FC5 = 768
_SLAB_W = 896


def vae_kernel(x_ref, eps_ref, w_ref, b_ref, head_ref, recon_ref):
    x = x_ref[...]                                    # (bs, 128); cols >= 11 are zero

    def dense(v, lo, hi):
        return (jnp.dot(v, w_ref[:, lo:hi], preferred_element_type=jnp.float32)
                + b_ref[:, lo:hi])

    # ----- encode -----
    h = jnp.maximum(dense(x, _OFF_FC1, _OFF_FC1 + PAD), 0.0)       # fc1 + relu
    h = jnp.maximum(dense(h, _OFF_FC2, _OFF_FC2 + PAD), 0.0)       # fc2 + relu
    head = dense(h, _OFF_HEAD, _OFF_HEAD + HEAD_W)                 # fused fc_mu|fc_logvar
    head_ref[...] = head                                           # lane-dense (bs, 256)

    # ----- reparameterize -----  (slices at 128-lane boundaries: no shuffles)
    mu = head[:, 0:PAD]
    logvar = head[:, PAD:HEAD_W]
    # padded lanes: logvar==0 -> std==1, eps==0 -> z padded lanes stay 0
    z = mu + eps_ref[...] * jnp.exp(0.5 * logvar)

    # ----- decode -----
    d = jnp.maximum(dense(z, _OFF_FC3, _OFF_FC3 + PAD), 0.0)       # fc3 + relu
    d = jnp.maximum(dense(d, _OFF_FC4, _OFF_FC4 + PAD), 0.0)       # fc4 + relu
    recon_ref[...] = dense(d, _OFF_FC5, _OFF_FC5 + PAD)            # fc5, lane-dense (bs, 128)


def pack_params(params):
    """Zero-pad all weights/biases to lane-aligned shapes and pack into 2 slabs."""
    (w1, b1, w2, b2, wmu, bmu, wlv, blv, w3, b3, w4, b4, w5, b5) = params

    def wpad(w):
        out = jnp.zeros((PAD, PAD), jnp.float32)
        return out.at[: w.shape[0], : w.shape[1]].set(w)

    def bpad(b, width=PAD):
        out = jnp.zeros((1, width), jnp.float32)
        return out.at[:, : b.shape[-1]].set(b.reshape(1, -1))

    # Fused mu|logvar head: mu -> lanes [0,10), logvar -> lanes [128,138).
    w_head = (jnp.zeros((PAD, HEAD_W), jnp.float32)
              .at[:HIDDEN_DIM, 0:LATENT_DIM].set(wmu)
              .at[:HIDDEN_DIM, PAD:PAD + LATENT_DIM].set(wlv))
    b_head = (jnp.zeros((1, HEAD_W), jnp.float32)
              .at[:, 0:LATENT_DIM].set(bmu.reshape(1, -1))
              .at[:, PAD:PAD + LATENT_DIM].set(blv.reshape(1, -1)))

    W = jnp.concatenate([wpad(w1), wpad(w2), w_head, wpad(w3), wpad(w4), wpad(w5)], axis=1)
    b = jnp.concatenate([bpad(b1), bpad(b2), b_head, bpad(b3), bpad(b4), bpad(b5)], axis=1)
    return W, b   # (128, 896), (1, 896)


def _round_up(n, m):
    return ((n + m - 1) // m) * m


@functools.partial(jax.jit, static_argnames=("block_b",))
def vae_forward(x, eps, params, *, block_b=1024):
    # block_b notes: ~256-512 is plenty on v5e; 1024-4096 on v6e/v7x (stay well
    # inside the 32 MiB default scoped VMEM; raise vmem_limit_bytes if larger).
    B = x.shape[0]
    bb = min(block_b, _round_up(B, 8))        # collapse grid for small batches
    B_pad = _round_up(B, bb)                  # no divisibility requirement on B

    x_pad = jnp.zeros((B_pad, PAD), jnp.float32).at[:B, :INPUT_DIM].set(x)
    eps_pad = jnp.zeros((B_pad, PAD), jnp.float32).at[:B, :LATENT_DIM].set(eps)
    W, bvec = pack_params(params)

    head_out, recon_out = pl.pallas_call(
        vae_kernel,
        out_shape=(
            jax.ShapeDtypeStruct((B_pad, HEAD_W), jnp.float32),   # [mu | logvar] slab
            jax.ShapeDtypeStruct((B_pad, PAD), jnp.float32),      # recon slab
        ),
        grid_spec=pltpu.PrefetchScalarGridSpec(
            num_scalar_prefetch=0,
            grid=(B_pad // bb,),
            in_specs=[
                pl.BlockSpec((bb, PAD), lambda i: (i, 0)),        # x (padded)
                pl.BlockSpec((bb, PAD), lambda i: (i, 0)),        # eps (padded)
                pl.BlockSpec((PAD, _SLAB_W), lambda i: (0, 0)),   # packed weights (resident)
                pl.BlockSpec((1, _SLAB_W), lambda i: (0, 0)),     # packed biases (resident)
            ],
            out_specs=(
                pl.BlockSpec((bb, HEAD_W), lambda i: (i, 0)),
                pl.BlockSpec((bb, PAD), lambda i: (i, 0)),
            ),
        ),
        compiler_params=pltpu.CompilerParams(
            dimension_semantics=("parallel",),                    # megacore over batch
        ),
    )(x_pad, eps_pad, W, bvec)

    recon = recon_out[:B, :INPUT_DIM]
    mu = head_out[:B, :LATENT_DIM]
    logvar = head_out[:B, PAD:PAD + LATENT_DIM]
    return recon, mu, logvar


def init_params(key):
    """Deterministic parameter init (shapes match the PyTorch module; W is [in, out])."""
    keys = jax.random.split(key, 7)

    def linear(k, fan_in, fan_out):
        bound = 1.0 / jnp.sqrt(fan_in)
        kw, kb = jax.random.split(k)
        w = jax.random.uniform(kw, (fan_in, fan_out), jnp.float32, -bound, bound)
        b = jax.random.uniform(kb, (1, fan_out), jnp.float32, -bound, bound)
        return w, b

    w1, b1 = linear(keys[0], INPUT_DIM, HIDDEN_DIM)      # fc1
    w2, b2 = linear(keys[1], HIDDEN_DIM, HIDDEN_DIM)     # fc2
    wmu, bmu = linear(keys[2], HIDDEN_DIM, LATENT_DIM)   # fc_mu
    wlv, blv = linear(keys[3], HIDDEN_DIM, LATENT_DIM)   # fc_logvar
    w3, b3 = linear(keys[4], LATENT_DIM, HIDDEN_DIM)     # fc3
    w4, b4 = linear(keys[5], HIDDEN_DIM, HIDDEN_DIM)     # fc4
    w5, b5 = linear(keys[6], HIDDEN_DIM, INPUT_DIM)      # fc5
    return (w1, b1, w2, b2, wmu, bmu, wlv, blv, w3, b3, w4, b4, w5, b5)


def vae_reference(x, eps, params):
    """Pure-JAX reference of the same forward pass."""
    (w1, b1, w2, b2, wmu, bmu, wlv, blv, w3, b3, w4, b4, w5, b5) = params
    h = jnp.maximum(x @ w1 + b1, 0.0)
    h = jnp.maximum(h @ w2 + b2, 0.0)
    mu = h @ wmu + bmu
    logvar = h @ wlv + blv
    z = mu + eps * jnp.exp(0.5 * logvar)
    d = jnp.maximum(z @ w3 + b3, 0.0)
    d = jnp.maximum(d @ w4 + b4, 0.0)
    recon = d @ w5 + b5
    return recon, mu, logvar


if __name__ == "__main__":
    key = jax.random.PRNGKey(0)
    k_params, k_x, k_eps = jax.random.split(key, 3)

    B = 16
    x = jax.random.normal(k_x, (B, INPUT_DIM), jnp.float32)
    # TODO(synk): torch.randn_like(std) inside reparameterize is sampled here in
    # the wrapper (deterministic key) and passed into the kernel.
    eps = jax.random.normal(k_eps, (B, LATENT_DIM), jnp.float32)
    params = init_params(k_params)

    recon, mu, logvar = vae_forward(x, eps, params)
    jax.block_until_ready((recon, mu, logvar))

    # Correctness check against pure-JAX reference.
    r_ref, mu_ref, lv_ref = vae_reference(x, eps, params)
    assert jnp.allclose(recon, r_ref, atol=1e-5, rtol=1e-5)
    assert jnp.allclose(mu, mu_ref, atol=1e-5, rtol=1e-5)
    assert jnp.allclose(logvar, lv_ref, atol=1e-5, rtol=1e-5)

    # Also exercise a non-divisible, multi-step batch path.
    B2 = 300
    x2 = jax.random.normal(k_x, (B2, INPUT_DIM), jnp.float32)
    eps2 = jax.random.normal(k_eps, (B2, LATENT_DIM), jnp.float32)
    r2, m2, l2 = vae_forward(x2, eps2, params, block_b=128)
    jax.block_until_ready((r2, m2, l2))
    r2r, m2r, l2r = vae_reference(x2, eps2, params)
    assert jnp.allclose(r2, r2r, atol=1e-5, rtol=1e-5)
    assert jnp.allclose(m2, m2r, atol=1e-5, rtol=1e-5)
    assert jnp.allclose(l2, l2r, atol=1e-5, rtol=1e-5)

    print("KERNEL_OK")
</pallas_src>

<mosaic_0001>
module attributes {stable_mosaic.version = 11 : i64} {
  func.func @vae_kernel(%arg0: i32, %arg1: memref<16x128xf32, #tpu.memory_space<vmem>>, %arg2: memref<16x128xf32, #tpu.memory_space<vmem>>, %arg3: memref<128x896xf32, #tpu.memory_space<vmem>>, %arg4: memref<1x896xf32, #tpu.memory_space<vmem>>, %arg5: memref<16x256xf32, #tpu.memory_space<vmem>>, %arg6: memref<16x128xf32, #tpu.memory_space<vmem>>) attributes {dimension_semantics = [#tpu.dimension_semantics<parallel>], iteration_bounds = array<i64: 1>, scalar_prefetch = 0 : i64, scratch_operands = 0 : i64, tpu.core_type = #tpu.core_type<tc>, window_params = [{transform_indices = @transform_0, window_bounds = array<i64: 16, 128>}, {transform_indices = @transform_1, window_bounds = array<i64: 16, 128>}, {pipeline_mode = #tpu.pipeline_mode<synchronous>, transform_indices = @transform_2, window_bounds = array<i64: 128, 896>}, {pipeline_mode = #tpu.pipeline_mode<synchronous>, transform_indices = @transform_3, window_bounds = array<i64: 1, 896>}, {transform_indices = @transform_4, window_bounds = array<i64: 16, 256>}, {transform_indices = @transform_5, window_bounds = array<i64: 16, 128>}]} {
    %c0 = arith.constant 0 : index
    %c0_0 = arith.constant 0 : index
    %0 = vector.load %arg1[%c0, %c0_0] : memref<16x128xf32, #tpu.memory_space<vmem>>, vector<16x128xf32>
    %c0_1 = arith.constant 0 : index
    %c0_2 = arith.constant 0 : index
    %1 = vector.load %arg3[%c0_1, %c0_2] : memref<128x896xf32, #tpu.memory_space<vmem>>, vector<128x128xf32>
    %cst = arith.constant dense<0.000000e+00> : vector<16x128xf32>
    %2 = tpu.matmul %0, %1, %cst {dimension_numbers = #tpu.dot_dimension_numbers<[1], [0], [0], [1], [0, 0, 1, 1], [], []>} : vector<16x128xf32>, vector<128x128xf32>, vector<16x128xf32> -> vector<16x128xf32>
    %c0_3 = arith.constant 0 : index
    %c0_4 = arith.constant 0 : index
    %3 = vector.load %arg4[%c0_3, %c0_4] : memref<1x896xf32, #tpu.memory_space<vmem>>, vector<1x128xf32>
    %4 = vector.broadcast %3 : vector<1x128xf32> to vector<16x128xf32>
    %5 = arith.addf %2, %4 : vector<16x128xf32>
    %cst_5 = arith.constant 0.000000e+00 : f32
    %6 = vector.broadcast %cst_5 : f32 to vector<16x128xf32>
    %7 = arith.maximumf %5, %6 : vector<16x128xf32>
    %c0_6 = arith.constant 0 : index
    %c128 = arith.constant 128 : index
    %8 = vector.load %arg3[%c0_6, %c128] : memref<128x896xf32, #tpu.memory_space<vmem>>, vector<128x128xf32>
    %cst_7 = arith.constant dense<0.000000e+00> : vector<16x128xf32>
    %9 = tpu.matmul %7, %8, %cst_7 {dimension_numbers = #tpu.dot_dimension_numbers<[1], [0], [0], [1], [0, 0, 1, 1], [], []>} : vector<16x128xf32>, vector<128x128xf32>, vector<16x128xf32> -> vector<16x128xf32>
    %c0_8 = arith.constant 0 : index
    %c128_9 = arith.constant 128 : index
    %10 = vector.load %arg4[%c0_8, %c128_9] : memref<1x896xf32, #tpu.memory_space<vmem>>, vector<1x128xf32>
    %11 = vector.broadcast %10 : vector<1x128xf32> to vector<16x128xf32>
    %12 = arith.addf %9, %11 : vector<16x128xf32>
    %cst_10 = arith.constant 0.000000e+00 : f32
    %13 = vector.broadcast %cst_10 : f32 to vector<16x128xf32>
    %14 = arith.maximumf %12, %13 : vector<16x128xf32>
    %c0_11 = arith.constant 0 : index
    %c256 = arith.constant 256 : index
    %15 = vector.load %arg3[%c0_11, %c256] : memref<128x896xf32, #tpu.memory_space<vmem>>, vector<128x256xf32>
    %cst_12 = arith.constant dense<0.000000e+00> : vector<16x256xf32>
    %16 = tpu.matmul %14, %15, %cst_12 {dimension_numbers = #tpu.dot_dimension_numbers<[1], [0], [0], [1], [0, 0, 1, 1], [], []>} : vector<16x128xf32>, vector<128x256xf32>, vector<16x256xf32> -> vector<16x256xf32>
    %c0_13 = arith.constant 0 : index
    %c256_14 = arith.constant 256 : index
    %17 = vector.load %arg4[%c0_13, %c256_14] : memref<1x896xf32, #tpu.memory_space<vmem>>, vector<1x256xf32>
    %18 = vector.broadcast %17 : vector<1x256xf32> to vector<16x256xf32>
    %19 = arith.addf %16, %18 : vector<16x256xf32>
    %c0_15 = arith.constant 0 : index
    %c0_16 = arith.constant 0 : index
    %20 = vector.load %arg5[%c0_15, %c0_16] : memref<16x256xf32, #tpu.memory_space<vmem>>, vector<16x256xf32>
    tpu.vector_store %arg5[%c0_15, %c0_16], %19 {strides = array<i32>} : memref<16x256xf32, #tpu.memory_space<vmem>>, vector<16x256xf32>,
    %21 = vector.extract_strided_slice %19 {offsets = [0, 0], sizes = [16, 128], strides = [1, 1]} : vector<16x256xf32> to vector<16x128xf32>
    %22 = vector.extract_strided_slice %19 {offsets = [0, 128], sizes = [16, 128], strides = [1, 1]} : vector<16x256xf32> to vector<16x128xf32>
    %c0_17 = arith.constant 0 : index
    %c0_18 = arith.constant 0 : index
    %23 = vector.load %arg2[%c0_17, %c0_18] : memref<16x128xf32, #tpu.memory_space<vmem>>, vector<16x128xf32>
    %cst_19 = arith.constant 5.000000e-01 : f32
    %24 = vector.broadcast %cst_19 : f32 to vector<16x128xf32>
    %25 = arith.mulf %24, %22 : vector<16x128xf32>
    %26 = math.exp %25 : vector<16x128xf32>
    %27 = arith.mulf %23, %26 : vector<16x128xf32>
    %28 = arith.addf %21, %27 : vector<16x128xf32>
    %c0_20 = arith.constant 0 : index
    %c512 = arith.constant 512 : index
    %29 = vector.load %arg3[%c0_20, %c512] : memref<128x896xf32, #tpu.memory_space<vmem>>, vector<128x128xf32>
    %cst_21 = arith.constant dense<0.000000e+00> : vector<16x128xf32>
    %30 = tpu.matmul %28, %29, %cst_21 {dimension_numbers = #tpu.dot_dimension_numbers<[1], [0], [0], [1], [0, 0, 1, 1], [], []>} : vector<16x128xf32>, vector<128x128xf32>, vector<16x128xf32> -> vector<16x128xf32>
    %c0_22 = arith.constant 0 : index
    %c512_23 = arith.constant 512 : index
    %31 = vector.load %arg4[%c0_22, %c512_23] : memref<1x896xf32, #tpu.memory_space<vmem>>, vector<1x128xf32>
    %32 = vector.broadcast %31 : vector<1x128xf32> to vector<16x128xf32>
    %33 = arith.addf %30, %32 : vector<16x128xf32>
    %cst_24 = arith.constant 0.000000e+00 : f32
    %34 = vector.broadcast %cst_24 : f32 to vector<16x128xf32>
    %35 = arith.maximumf %33, %34 : vector<16x128xf32>
    %c0_25 = arith.constant 0 : index
    %c640 = arith.constant 640 : index
    %36 = vector.load %arg3[%c0_25, %c640] : memref<128x896xf32, #tpu.memory_space<vmem>>, vector<128x128xf32>
    %cst_26 = arith.constant dense<0.000000e+00> : vector<16x128xf32>
    %37 = tpu.matmul %35, %36, %cst_26 {dimension_numbers = #tpu.dot_dimension_numbers<[1], [0], [0], [1], [0, 0, 1, 1], [], []>} : vector<16x128xf32>, vector<128x128xf32>, vector<16x128xf32> -> vector<16x128xf32>
    %c0_27 = arith.constant 0 : index
    %c640_28 = arith.constant 640 : index
    %38 = vector.load %arg4[%c0_27, %c640_28] : memref<1x896xf32, #tpu.memory_space<vmem>>, vector<1x128xf32>
    %39 = vector.broadcast %38 : vector<1x128xf32> to vector<16x128xf32>
    %40 = arith.addf %37, %39 : vector<16x128xf32>
    %cst_29 = arith.constant 0.000000e+00 : f32
    %41 = vector.broadcast %cst_29 : f32 to vector<16x128xf32>
    %42 = arith.maximumf %40, %41 : vector<16x128xf32>
    %c0_30 = arith.constant 0 : index
    %c768 = arith.constant 768 : index
    %43 = vector.load %arg3[%c0_30, %c768] : memref<128x896xf32, #tpu.memory_space<vmem>>, vector<128x128xf32>
    %cst_31 = arith.constant dense<0.000000e+00> : vector<16x128xf32>
    %44 = tpu.matmul %42, %43, %cst_31 {dimension_numbers = #tpu.dot_dimension_numbers<[1], [0], [0], [1], [0, 0, 1, 1], [], []>} : vector<16x128xf32>, vector<128x128xf32>, vector<16x128xf32> -> vector<16x128xf32>
    %c0_32 = arith.constant 0 : index
    %c768_33 = arith.constant 768 : index
    %45 = vector.load %arg4[%c0_32, %c768_33] : memref<1x896xf32, #tpu.memory_space<vmem>>, vector<1x128xf32>
    %46 = vector.broadcast %45 : vector<1x128xf32> to vector<16x128xf32>
    %47 = arith.addf %44, %46 : vector<16x128xf32>
    %c0_34 = arith.constant 0 : index
    %c0_35 = arith.constant 0 : index
    %48 = vector.load %arg6[%c0_34, %c0_35] : memref<16x128xf32, #tpu.memory_space<vmem>>, vector<16x128xf32>
    tpu.vector_store %arg6[%c0_34, %c0_35], %47 {strides = array<i32>} : memref<16x128xf32, #tpu.memory_space<vmem>>, vector<16x128xf32>,
    return
  }
  func.func @transform_0(%arg0: i32) -> (i32, i32) {
    %c0_i32 = arith.constant 0 : i32
    %c0_i32_0 = arith.constant 0 : i32
    return %arg0, %c0_i32 : i32, i32
  }
  func.func @transform_1(%arg0: i32) -> (i32, i32) {
    %c0_i32 = arith.constant 0 : i32
    %c0_i32_0 = arith.constant 0 : i32
    return %arg0, %c0_i32 : i32, i32
  }
  func.func @transform_2(%arg0: i32) -> (i32, i32) {
    %c0_i32 = arith.constant 0 : i32
    %c0_i32_0 = arith.constant 0 : i32
    %c0_i32_1 = arith.constant 0 : i32
    return %c0_i32, %c0_i32_0 : i32, i32
  }
  func.func @transform_3(%arg0: i32) -> (i32, i32) {
    %c0_i32 = arith.constant 0 : i32
    %c0_i32_0 = arith.constant 0 : i32
    %c0_i32_1 = arith.constant 0 : i32
    return %c0_i32, %c0_i32_0 : i32, i32
  }
  func.func @transform_4(%arg0: i32) -> (i32, i32) {
    %c0_i32 = arith.constant 0 : i32
    %c0_i32_0 = arith.constant 0 : i32
    return %arg0, %c0_i32 : i32, i32
  }
  func.func @transform_5(%arg0: i32) -> (i32, i32) {
    %c0_i32 = arith.constant 0 : i32
    %c0_i32_0 = arith.constant 0 : i32
    return %arg0, %c0_i32 : i32, i32
  }
}

</mosaic_0001>

<llo_original>
// kernel: vae_forward.1
$region0: #{vae_forward.1}
  #allocation0 [shape = 'u32[]', space=smem, size = 0x4, offset = 0x4, fixed_abs, tag = 'smem constant byte address 0x4 - core index']
  #allocation1 [shape = 'u32[72,128]{1,0:T(1,128)}', space=vmem, size = 0x9000, scoped, tag = 'internal scratch']
  %s0 = inlined_call_operand.vmem [shape: f32[16,128], index: 0, kind: input, shape index: {}]
  %s1 = inlined_call_operand.vmem [shape: f32[16,128], index: 1, kind: input, shape index: {}]
  %s2 = inlined_call_operand.vmem [shape: f32[128,896], index: 2, kind: input, shape index: {}]
  %s3 = inlined_call_operand.vmem [shape: f32[1,896], index: 3, kind: input, shape index: {}]
  %s4 = inlined_call_operand.vmem [shape: f32[16,256], index: 4, kind: output, shape index: {0}]
  %s5 = inlined_call_operand.hbm [shape: f32[16,128], index: 5, kind: output, shape index: {1}]
  %6 = xla_tuple %s4, %s5
  %s7 = sld [smem:[#allocation0]]
  $region34: #{vae_forward.1} parent=0
    _
  %s9 = ssub.s32 1, %s7
  %s10 = scalar_select 0, %s9, %s7
  $region1: #{vae_forward.1} parent=0
    #allocation2 [shape = 'u8[8192]{0}', space=vmem, size = 0x2000, scoped, tag = 'output window, operand 1, single buffered']
    #allocation3 [shape = 's32[1]{0}', space=sflag, size = 0x4, scoped, tag = 'scoped memory for vae_forward.1']
    %11 = vsyncpa [#allocation3], 0
    // Predicated region
    $region2: #{vae_forward.1} parent=1 // pred_check
      _
    $region3: #{vae_forward.1} parent=1 // pred_check_branch
      %13 = sbr.rel (0) target = $region5
    $region4: #{vae_forward.1} parent=1 // pred_region
      _
    $region5: #{vae_forward.1} parent=1 // pred_fallthru
      _
    // Predicated region
    $region6: #{vae_forward.1} parent=1 // pred_check
      _
    $region7: #{vae_forward.1} parent=1 // pred_check_branch
      %15 = sbr.rel (0) target = $region9
    $region8: #{vae_forward.1} parent=1 // pred_region
      _
    $region9: #{vae_forward.1} parent=1 // pred_fallthru
      _
    // Predicated region
    $region10: #{vae_forward.1} parent=1 // pred_check
      _
    $region11: #{vae_forward.1} parent=1 // pred_check_branch
      %17 = sbr.rel (0) target = $region13
    $region12: #{vae_forward.1} parent=1 // pred_region
      _
    $region13: #{vae_forward.1} parent=1 // pred_fallthru
      _
    // Predicated region
    $region14: #{vae_forward.1} parent=1 // pred_check
      _
    $region15: #{vae_forward.1} parent=1 // pred_check_branch
      %19 = sbr.rel (0) target = $region17
    $region16: #{vae_forward.1} parent=1 // pred_region
      _
    $region17: #{vae_forward.1} parent=1 // pred_fallthru
      _
    %v20 = vld [vmem:[%s0] sm:$0xff]
    %v21 = vld [vmem:[%s0 + $0x8] sm:$0xff]
    %v22 = vld [vmem:[%s2] sm:$0xff]
    %v23 = vld [vmem:[%s2 + $0x38] sm:$0xff]
    %v24 = vld [vmem:[%s2 + $0x70] sm:$0xff]
    %v25 = vld [vmem:[%s2 + $0xa8] sm:$0xff]
    %v26 = vld [vmem:[%s2 + $0xe0] sm:$0xff]
    %v27 = vld [vmem:[%s2 + $0x118] sm:$0xff]
    %v28 = vld [vmem:[%s2 + $0x150] sm:$0xff]
    %v29 = vld [vmem:[%s2 + $0x188] sm:$0xff]
    %v30 = vld [vmem:[%s2 + $0x1c0] sm:$0xff]
    %v31 = vld [vmem:[%s2 + $0x1f8] sm:$0xff]
    %v32 = vld [vmem:[%s2 + $0x230] sm:$0xff]
    %v33 = vld [vmem:[%s2 + $0x268] sm:$0xff]
    %v34 = vld [vmem:[%s2 + $0x2a0] sm:$0xff]
    %v35 = vld [vmem:[%s2 + $0x2d8] sm:$0xff]
    %v36 = vld [vmem:[%s2 + $0x310] sm:$0xff]
    %v37 = vld [vmem:[%s2 + $0x348] sm:$0xff]
    %v38 = vld [vmem:[%s3] sm:$0x1]
    %v40 = vperm.slane %v38, 0
    %42 = vmatpush.msra.mxu0 %v37
    %43 = vmatpush.msra.mxu0 %v36
    %44 = vmatpush.msra.mxu0 %v35
    %45 = vmatpush.msra.mxu0 %v34
    %46 = vmatpush.msra.mxu0 %v33
    %47 = vmatpush.msra.mxu0 %v32
    %48 = vmatpush.msra.mxu0 %v31
    %49 = vmatpush.msra.mxu0 %v30
    %50 = vmatpush.msra.mxu0 %v29
    %51 = vmatpush.msra.mxu0 %v28
    %52 = vmatpush.msra.mxu0 %v27
    %53 = vmatpush.msra.mxu0 %v26
    %54 = vmatpush.msra.mxu0 %v25
    %55 = vmatpush.msra.mxu0 %v24
    %56 = vmatpush.msra.mxu0 %v23
    %57 = vmatpush.msra.mxu0 %v22
    %58 = vmatmul.f32.gmra.mxu0 %v20
    %v59 = vpop.f32.mrf.mxu0
    %v60 = vadd.f32 %v40, %v59
    %61 = vmatmul.f32.gmra.mxu0 %v21
    %v62 = vpop.f32.mrf.mxu0
    %v63 = vadd.f32 %v40, %v62
    %64 = vdwg.mxu0
    %v65 = vmax.f32 %v60, 0.0
    %v66 = vmax.f32 %v63, 0.0
    %v67 = vld [vmem:[%s2 + $0x8] sm:$0xff]
    %v68 = vld [vmem:[%s2 + $0x40] sm:$0xff]
    %v69 = vld [vmem:[%s2 + $0x78] sm:$0xff]
    %v70 = vld [vmem:[%s2 + $0xb0] sm:$0xff]
    %v71 = vld [vmem:[%s2 + $0xe8] sm:$0xff]
    %v72 = vld [vmem:[%s2 + $0x120] sm:$0xff]
    %v73 = vld [vmem:[%s2 + $0x158] sm:$0xff]
    %v74 = vld [vmem:[%s2 + $0x190] sm:$0xff]
    %v75 = vld [vmem:[%s2 + $0x1c8] sm:$0xff]
    %v76 = vld [vmem:[%s2 + $0x200] sm:$0xff]
    %v77 = vld [vmem:[%s2 + $0x238] sm:$0xff]
    %v78 = vld [vmem:[%s2 + $0x270] sm:$0xff]
    %v79 = vld [vmem:[%s2 + $0x2a8] sm:$0xff]
    %v80 = vld [vmem:[%s2 + $0x2e0] sm:$0xff]
    %v81 = vld [vmem:[%s2 + $0x318] sm:$0xff]
    %v82 = vld [vmem:[%s2 + $0x350] sm:$0xff]
    %v83 = vld [vmem:[%s3 + $0x1] sm:$0x1]
    %v85 = vperm.slane %v83, 0
    %87 = vmatpush.msra.mxu0 %v82
    %88 = vmatpush.msra.mxu0 %v81
    %89 = vmatpush.msra.mxu0 %v80
    %90 = vmatpush.msra.mxu0 %v79
    %91 = vmatpush.msra.mxu0 %v78
    %92 = vmatpush.msra.mxu0 %v77
    %93 = vmatpush.msra.mxu0 %v76
    %94 = vmatpush.msra.mxu0 %v75
    %95 = vmatpush.msra.mxu0 %v74
    %96 = vmatpush.msra.mxu0 %v73
    %97 = vmatpush.msra.mxu0 %v72
    %98 = vmatpush.msra.mxu0 %v71
    %99 = vmatpush.msra.mxu0 %v70
    %100 = vmatpush.msra.mxu0 %v69
    %101 = vmatpush.msra.mxu0 %v68
    %102 = vmatpush.msra.mxu0 %v67
    %103 = vmatmul.f32.gmra.mxu0 %v65
    %v104 = vpop.f32.mrf.mxu0
    %v105 = vadd.f32 %v85, %v104
    %106 = vmatmul.f32.gmra.mxu0 %v66
    %v107 = vpop.f32.mrf.mxu0
    %v108 = vadd.f32 %v85, %v107
    %109 = vdwg.mxu0
    %v110 = vmax.f32 %v105, 0.0
    %v111 = vmax.f32 %v108, 0.0
    %v112 = vld [vmem:[%s2 + $0x10] sm:$0xff]
    %v113 = vld [vmem:[%s2 + $0x18] sm:$0xff]
    %v114 = vld [vmem:[%s2 + $0x48] sm:$0xff]
    %v115 = vld [vmem:[%s2 + $0x50] sm:$0xff]
    %v116 = vld [vmem:[%s2 + $0x80] sm:$0xff]
    %v117 = vld [vmem:[%s2 + $0x88] sm:$0xff]
    %v118 = vld [vmem:[%s2 + $0xb8] sm:$0xff]
    %v119 = vld [vmem:[%s2 + $0xc0] sm:$0xff]
    %v120 = vld [vmem:[%s2 + $0xf0] sm:$0xff]
    %v121 = vld [vmem:[%s2 + $0xf8] sm:$0xff]
    %v122 = vld [vmem:[%s2 + $0x128] sm:$0xff]
    %v123 = vld [vmem:[%s2 + $0x130] sm:$0xff]
    %v124 = vld [vmem:[%s2 + $0x160] sm:$0xff]
    %v125 = vld [vmem:[%s2 + $0x168] sm:$0xff]
    %v126 = vld [vmem:[%s2 + $0x198] sm:$0xff]
    %v127 = vld [vmem:[%s2 + $0x1a0] sm:$0xff]
    %v128 = vld [vmem:[%s2 + $0x1d0] sm:$0xff]
    %v129 = vld [vmem:[%s2 + $0x1d8] sm:$0xff]
    %v130 = vld [vmem:[%s2 + $0x208] sm:$0xff]
    %v131 = vld [vmem:[%s2 + $0x210] sm:$0xff]
    %v132 = vld [vmem:[%s2 + $0x240] sm:$0xff]
    %v133 = vld [vmem:[%s2 + $0x248] sm:$0xff]
    %v134 = vld [vmem:[%s2 + $0x278] sm:$0xff]
    %v135 = vld [vmem:[%s2 + $0x280] sm:$0xff]
    %v136 = vld [vmem:[%s2 + $0x2b0] sm:$0xff]
    %v137 = vld [vmem:[%s2 + $0x2b8] sm:$0xff]
    %v138 = vld [vmem:[%s2 + $0x2e8] sm:$0xff]
    %v139 = vld [vmem:[%s2 + $0x2f0] sm:$0xff]
    %v140 = vld [vmem:[%s2 + $0x320] sm:$0xff]
    %v141 = vld [vmem:[%s2 + $0x328] sm:$0xff]
    %v142 = vld [vmem:[%s2 + $0x358] sm:$0xff]
    %v143 = vld [vmem:[%s2 + $0x360] sm:$0xff]
    %v144 = vld [vmem:[%s3 + $0x2] sm:$0x3]
    %v146 = vperm.slane %v144, 0
    %v147 = vperm.slane %v144, 1
    %150 = vmatpush.msra.mxu0 %v142
    %151 = vmatpush.msra.mxu0 %v140
    %152 = vmatpush.msra.mxu0 %v138
    %153 = vmatpush.msra.mxu0 %v136
    %154 = vmatpush.msra.mxu0 %v134
    %155 = vmatpush.msra.mxu0 %v132
    %156 = vmatpush.msra.mxu0 %v130
    %157 = vmatpush.msra.mxu0 %v128
    %158 = vmatpush.msra.mxu0 %v126
    %159 = vmatpush.msra.mxu0 %v124
    %160 = vmatpush.msra.mxu0 %v122
    %161 = vmatpush.msra.mxu0 %v120
    %162 = vmatpush.msra.mxu0 %v118
    %163 = vmatpush.msra.mxu0 %v116
    %164 = vmatpush.msra.mxu0 %v114
    %165 = vmatpush.msra.mxu0 %v112
    %166 = vmatmul.f32.gmra.mxu0 %v110
    %v167 = vpop.f32.mrf.mxu0
    %v168 = vadd.f32 %v146, %v167
    %169 = vmatmul.f32.gmra.mxu0 %v111
    %v170 = vpop.f32.mrf.mxu0
    %v171 = vadd.f32 %v146, %v170
    %172 = vdwg.mxu0
    %173 = vmatpush.msra.mxu0 %v143
    %174 = vmatpush.msra.mxu0 %v141
    %175 = vmatpush.msra.mxu0 %v139
    %176 = vmatpush.msra.mxu0 %v137
    %177 = vmatpush.msra.mxu0 %v135
    %178 = vmatpush.msra.mxu0 %v133
    %179 = vmatpush.msra.mxu0 %v131
    %180 = vmatpush.msra.mxu0 %v129
    %181 = vmatpush.msra.mxu0 %v127
    %182 = vmatpush.msra.mxu0 %v125
    %183 = vmatpush.msra.mxu0 %v123
    %184 = vmatpush.msra.mxu0 %v121
    %185 = vmatpush.msra.mxu0 %v119
    %186 = vmatpush.msra.mxu0 %v117
    %187 = vmatpush.msra.mxu0 %v115
    %188 = vmatpush.msra.mxu0 %v113
    %189 = vmatmul.f32.gmra.mxu0 %v110
    %v190 = vpop.f32.mrf.mxu0
    %v191 = vadd.f32 %v147, %v190
    %192 = vmatmul.f32.gmra.mxu0 %v111
    %v193 = vpop.f32.mrf.mxu0
    %v194 = vadd.f32 %v147, %v193
    %195 = vdwg.mxu0
    %196 = vst [vmem:[%s4] sm:$0xff] %v168
    %197 = vst [vmem:[%s4 + $0x8] sm:$0xff] %v191
    %198 = vst [vmem:[%s4 + $0x10] sm:$0xff] %v171
    %199 = vst [vmem:[%s4 + $0x18] sm:$0xff] %v194
    %v200 = vld [vmem:[%s1] sm:$0xff]
    %v201 = vld [vmem:[%s1 + $0x8] sm:$0xff]
    %v202 = vmul.f32 %v191, 0.5
    %v203 = vmul.f32 %v194, 0.5
    %v204 = vmul.f32 %v202, 1.442695
    %v205 = vpow.pop %v204
    %v206 = vmul.f32 %v203, 1.442695
    %v207 = vpow.pop %v206
    %v208 = vmul.f32 %v200, %v205
    %v209 = vmul.f32 %v201, %v207
    %v210 = vadd.f32 %v168, %v208
    %v211 = vadd.f32 %v171, %v209
    %v212 = vld [vmem:[%s2 + $0x20] sm:$0xff]
    %v213 = vld [vmem:[%s2 + $0x58] sm:$0xff]
    %v214 = vld [vmem:[%s2 + $0x90] sm:$0xff]
    %v215 = vld [vmem:[%s2 + $0xc8] sm:$0xff]
    %v216 = vld [vmem:[%s2 + $0x100] sm:$0xff]
    %v217 = vld [vmem:[%s2 + $0x138] sm:$0xff]
    %v218 = vld [vmem:[%s2 + $0x170] sm:$0xff]
    %v219 = vld [vmem:[%s2 + $0x1a8] sm:$0xff]
    %v220 = vld [vmem:[%s2 + $0x1e0] sm:$0xff]
    %v221 = vld [vmem:[%s2 + $0x218] sm:$0xff]
    %v222 = vld [vmem:[%s2 + $0x250] sm:$0xff]
    %v223 = vld [vmem:[%s2 + $0x288] sm:$0xff]
    %v224 = vld [vmem:[%s2 + $0x2c0] sm:$0xff]
    %v225 = vld [vmem:[%s2 + $0x2f8] sm:$0xff]
    %v226 = vld [vmem:[%s2 + $0x330] sm:$0xff]
    %v227 = vld [vmem:[%s2 + $0x368] sm:$0xff]
    %v228 = vld [vmem:[%s3 + $0x4] sm:$0x1]
    %v230 = vperm.slane %v228, 0
    %232 = vmatpush.msra.mxu0 %v227
    %233 = vmatpush.msra.mxu0 %v226
    %234 = vmatpush.msra.mxu0 %v225
    %235 = vmatpush.msra.mxu0 %v224
    %236 = vmatpush.msra.mxu0 %v223
    %237 = vmatpush.msra.mxu0 %v222
    %238 = vmatpush.msra.mxu0 %v221
    %239 = vmatpush.msra.mxu0 %v220
    %240 = vmatpush.msra.mxu0 %v219
    %241 = vmatpush.msra.mxu0 %v218
    %242 = vmatpush.msra.mxu0 %v217
    %243 = vmatpush.msra.mxu0 %v216
    %244 = vmatpush.msra.mxu0 %v215
    %245 = vmatpush.msra.mxu0 %v214
    %246 = vmatpush.msra.mxu0 %v213
    %247 = vmatpush.msra.mxu0 %v212
    %248 = vmatmul.f32.gmra.mxu0 %v210
    %v249 = vpop.f32.mrf.mxu0
    %v250 = vadd.f32 %v230, %v249
    %251 = vmatmul.f32.gmra.mxu0 %v211
    %v252 = vpop.f32.mrf.mxu0
    %v253 = vadd.f32 %v230, %v252
    %254 = vdwg.mxu0
    %v255 = vmax.f32 %v250, 0.0
    %v256 = vmax.f32 %v253, 0.0
    %v257 = vld [vmem:[%s2 + $0x28] sm:$0xff]
    %v258 = vld [vmem:[%s2 + $0x60] sm:$0xff]
    %v259 = vld [vmem:[%s2 + $0x98] sm:$0xff]
    %v260 = vld [vmem:[%s2 + $0xd0] sm:$0xff]
    %v261 = vld [vmem:[%s2 + $0x108] sm:$0xff]
    %v262 = vld [vmem:[%s2 + $0x140] sm:$0xff]
    %v263 = vld [vmem:[%s2 + $0x178] sm:$0xff]
    %v264 = vld [vmem:[%s2 + $0x1b0] sm:$0xff]
    %v265 = vld [vmem:[%s2 + $0x1e8] sm:$0xff]
    %v266 = vld [vmem:[%s2 + $0x220] sm:$0xff]
    %v267 = vld [vmem:[%s2 + $0x258] sm:$0xff]
    %v268 = vld [vmem:[%s2 + $0x290] sm:$0xff]
    %v269 = vld [vmem:[%s2 + $0x2c8] sm:$0xff]
    %v270 = vld [vmem:[%s2 + $0x300] sm:$0xff]
    %v271 = vld [vmem:[%s2 + $0x338] sm:$0xff]
    %v272 = vld [vmem:[%s2 + $0x370] sm:$0xff]
    %v273 = vld [vmem:[%s3 + $0x5] sm:$0x1]
    %v275 = vperm.slane %v273, 0
    %277 = vmatpush.msra.mxu0 %v272
    %278 = vmatpush.msra.mxu0 %v271
    %279 = vmatpush.msra.mxu0 %v270
    %280 = vmatpush.msra.mxu0 %v269
    %281 = vmatpush.msra.mxu0 %v268
    %282 = vmatpush.msra.mxu0 %v267
    %283 = vmatpush.msra.mxu0 %v266
    %284 = vmatpush.msra.mxu0 %v265
    %285 = vmatpush.msra.mxu0 %v264
    %286 = vmatpush.msra.mxu0 %v263
    %287 = vmatpush.msra.mxu0 %v262
    %288 = vmatpush.msra.mxu0 %v261
    %289 = vmatpush.msra.mxu0 %v260
    %290 = vmatpush.msra.mxu0 %v259
    %291 = vmatpush.msra.mxu0 %v258
    %292 = vmatpush.msra.mxu0 %v257
    %293 = vmatmul.f32.gmra.mxu0 %v255
    %v294 = vpop.f32.mrf.mxu0
    %v295 = vadd.f32 %v275, %v294
    %296 = vmatmul.f32.gmra.mxu0 %v256
    %v297 = vpop.f32.mrf.mxu0
    %v298 = vadd.f32 %v275, %v297
    %299 = vdwg.mxu0
    %v300 = vmax.f32 %v295, 0.0
    %v301 = vmax.f32 %v298, 0.0
    %v302 = vld [vmem:[%s2 + $0x30] sm:$0xff]
    %v303 = vld [vmem:[%s2 + $0x68] sm:$0xff]
    %v304 = vld [vmem:[%s2 + $0xa0] sm:$0xff]
    %v305 = vld [vmem:[%s2 + $0xd8] sm:$0xff]
    %v306 = vld [vmem:[%s2 + $0x110] sm:$0xff]
    %v307 = vld [vmem:[%s2 + $0x148] sm:$0xff]
    %v308 = vld [vmem:[%s2 + $0x180] sm:$0xff]
    %v309 = vld [vmem:[%s2 + $0x1b8] sm:$0xff]
    %v310 = vld [vmem:[%s2 + $0x1f0] sm:$0xff]
    %v311 = vld [vmem:[%s2 + $0x228] sm:$0xff]
    %v312 = vld [vmem:[%s2 + $0x260] sm:$0xff]
    %v313 = vld [vmem:[%s2 + $0x298] sm:$0xff]
    %v314 = vld [vmem:[%s2 + $0x2d0] sm:$0xff]
    %v315 = vld [vmem:[%s2 + $0x308] sm:$0xff]
    %v316 = vld [vmem:[%s2 + $0x340] sm:$0xff]
    %v317 = vld [vmem:[%s2 + $0x378] sm:$0xff]
    %v318 = vld [vmem:[%s3 + $0x6] sm:$0x1]
    %v320 = vperm.slane %v318, 0
    %322 = vmatpush.msra.mxu0 %v317
    %323 = vmatpush.msra.mxu0 %v316
    %324 = vmatpush.msra.mxu0 %v315
    %325 = vmatpush.msra.mxu0 %v314
    %326 = vmatpush.msra.mxu0 %v313
    %327 = vmatpush.msra.mxu0 %v312
    %328 = vmatpush.msra.mxu0 %v311
    %329 = vmatpush.msra.mxu0 %v310
    %330 = vmatpush.msra.mxu0 %v309
    %331 = vmatpush.msra.mxu0 %v308
    %332 = vmatpush.msra.mxu0 %v307
    %333 = vmatpush.msra.mxu0 %v306
    %334 = vmatpush.msra.mxu0 %v305
    %335 = vmatpush.msra.mxu0 %v304
    %336 = vmatpush.msra.mxu0 %v303
    %337 = vmatpush.msra.mxu0 %v302
    %338 = vmatmul.f32.gmra.mxu0 %v300
    %v339 = vpop.f32.mrf.mxu0
    %v340 = vadd.f32 %v320, %v339
    %341 = vmatmul.f32.gmra.mxu0 %v301
    %v342 = vpop.f32.mrf.mxu0
    %v343 = vadd.f32 %v320, %v342
    %344 = vdwg.mxu0
    %345 = vst [vmem:[#allocation2] sm:$0xff] %v340
    %346 = vst [vmem:[#allocation2 + $0x8] sm:$0xff] %v343
    // Predicated region
    $region18: #{vae_forward.1} parent=1 // pred_check
      _
    $region19: #{vae_forward.1} parent=1 // pred_check_branch
      %348 = sbr.rel (0) target = $region21
    $region20: #{vae_forward.1} parent=1 // pred_region
      _
    $region21: #{vae_forward.1} parent=1 // pred_fallthru
      _
    // Predicated region
    $region22: #{vae_forward.1} parent=1 // pred_check
      _
    $region23: #{vae_forward.1} parent=1 // pred_check_branch
      %350 = sbr.rel (0) target = $region25
    $region24: #{vae_forward.1} parent=1 // pred_region
      %352 = vsyncadd [#allocation3], 0
      %s353 = sshll.u32 [#allocation2], 4
      %s354 = int_to_ptr.vmem [resolvable:$true] %s353
      %s355 = sshll.u32 %s5, 4
      %s356 = int_to_ptr.hbm [resolvable:$true] %s355
      %361 = dma.vmem_to_hbm [thread:$0]  %s354, 256, %s356, [#allocation3], 128, 128, 8
    $region25: #{vae_forward.1} parent=1 // pred_fallthru
      _
    // Predicated region
    $region26: #{vae_forward.1} parent=1 // pred_check
      _
    $region27: #{vae_forward.1} parent=1 // pred_check_branch
      %363 = sbr.rel (0) target = $region29
    $region28: #{vae_forward.1} parent=1 // pred_region
      _
    $region29: #{vae_forward.1} parent=1 // pred_fallthru
      _
    // Predicated region
    $region30: #{vae_forward.1} parent=1 // pred_check
      _
    $region31: #{vae_forward.1} parent=1 // pred_check_branch
      %365 = sbr.rel (0) target = $region33
    $region32: #{vae_forward.1} parent=1 // pred_region
      %367 = dma.done [#allocation3], 256
    $region33: #{vae_forward.1} parent=1 // pred_fallthru
      _
    %368 = vsyncpa [#allocation3], 1

</llo_original>
